<compile_context>
chip_gen: v7x
topology: tpu7x:2x2x1
jax: 0.10.0
libtpu: 0.0.40
codegen_flags: <defaults>
</compile_context>

<pallas_src>
import jax
import jax.numpy as jnp
from jax import lax
from jax.experimental import pallas as pl
from jax.experimental.pallas import tpu as pltpu

# ------------- small synthetic DINOv2 config (weights are NOT a checkpoint) --
PATCH = 14            # dinov2_vit*14 patch size
EMBED_DIM = 128       # synthetic small embed dim, lane-dense (real vit-s is 384)
NUM_HEADS = 4
HEAD_DIM = EMBED_DIM // NUM_HEADS
MLP_HIDDEN = 4 * EMBED_DIM
DEPTH = 2             # synthetic small depth (real vit-s is 12)
LN_EPS = 1e-6
SUBLANE = 8

# Row layout of the packed per-block vector array (width = EMBED_DIM each):
#   0 ln1.w  1 ln1.b  2 q.bias  3 k.bias  4 v.bias  5 proj.bias  6 ls1.gamma
#   7 ln2.w  8 ln2.b  9 fc2.bias 10 ls2.gamma  11..14 fc1.bias (MLP_HIDDEN/D rows)
NVEC = 11 + MLP_HIDDEN // EMBED_DIM


# --------------------------- helpers (in-kernel math) ------------------------
def _layernorm(x, w, b):
    mu = jnp.mean(x, axis=-1, keepdims=True)
    var = jnp.mean(jnp.square(x - mu), axis=-1, keepdims=True)
    return (x - mu) * lax.rsqrt(var + LN_EPS) * w + b


def _gelu_exact(x):
    # matches PyTorch nn.GELU() (erf form)
    return 0.5 * x * (1.0 + lax.erf(x * (1.0 / jnp.sqrt(2.0).astype(x.dtype))))


# --------------------------- patch-embed kernel -------------------------------
def _patch_embed_kernel(patches_ref, w_ref, b_ref, o_ref):
    # patches: (tm, K) bf16  w: (K, D) bf16  b: (1, D) f32  ->  o: (tm, D) f32
    acc = jnp.dot(patches_ref[...], w_ref[...], preferred_element_type=jnp.float32)
    o_ref[...] = (acc + b_ref[...]).astype(o_ref.dtype)


def patch_embed(patches, w, b, block_m=512):
    M, K = patches.shape
    D = w.shape[1]
    tm = min(block_m, M)
    return pl.pallas_call(
        _patch_embed_kernel,
        out_shape=jax.ShapeDtypeStruct((M, D), jnp.float32),
        grid=(pl.cdiv(M, tm),),
        in_specs=[pl.BlockSpec((tm, K), lambda i: (i, 0)),
                  pl.BlockSpec((K, D), lambda i: (0, 0)),
                  pl.BlockSpec((1, D), lambda i: (0, 0))],
        out_specs=pl.BlockSpec((tm, D), lambda i: (i, 0)),
        compiler_params=pltpu.CompilerParams(
            dimension_semantics=("parallel",)),
    )(patches, w, b)


# ----------------------- fused transformer-stack kernel -----------------------
def _encoder_kernel(tok_ref, base_ref, vec_ref, qkvw_ref, projw_ref,
                    fc1w_ref, fc2w_ref, o_ref):
    # Grid = (batch_blocks, depth).  Per (g, d): one transformer block applied
    # to the resident token activations (kept in the f32 output VMEM block
    # across the depth axis).
    Bb, TP, D = o_ref.shape
    n = tok_ref.shape[1]
    T = n + 1                       # real tokens (cls + patches); TP >= T padded
    H, hd = NUM_HEADS, HEAD_DIM
    M = Bb * TP
    nfc1 = MLP_HIDDEN // EMBED_DIM

    # ---- depth == 0: assemble tokens in-kernel (fused cls concat + pos add).
    # base row 0 = cls + pos[0], rows 1..T-1 = pos[1:], rows T.. = 0 (padding).
    @pl.when(pl.program_id(1) == 0)
    def _():
        o_ref[...] = jnp.broadcast_to(base_ref[...], (Bb, TP, D))
        o_ref[:, 1:1 + n, :] = o_ref[:, 1:1 + n, :] + tok_ref[...]

    vec = vec_ref[0]                                       # (NVEC, D) f32
    ln1w, ln1b = vec[0:1], vec[1:2]
    projb, ls1 = vec[5:6], vec[6:7]
    ln2w, ln2b = vec[7:8], vec[8:9]
    fc2b, ls2 = vec[9:10], vec[10:11]
    # single (1, 3D) qkv-bias row / (1, H) fc1-bias row, rebuilt by lane concat
    qkvb = jnp.concatenate([vec[2:3], vec[3:4], vec[4:5]], axis=-1)
    fc1b = jnp.concatenate([vec[11 + i:12 + i] for i in range(nfc1)], axis=-1)

    x = o_ref[...].reshape(M, D)                           # resident f32 activations

    # ---- attention branch:  x = x + ls1 * proj(MHSA(LN1(x))) ----
    xn = _layernorm(x, ln1w, ln1b)
    qkv = jnp.dot(xn.astype(jnp.bfloat16), qkvw_ref[0],
                  preferred_element_type=jnp.float32) + qkvb           # (M, 3D)

    def to_heads(t):                                       # (M, D) -> (H*Bb, TP, hd)
        t3 = t.reshape(Bb, TP, D).astype(jnp.bfloat16)
        return jnp.stack([t3[:, :, h * hd:(h + 1) * hd] for h in range(H)],
                         axis=0).reshape(H * Bb, TP, hd)

    qh = to_heads(qkv[:, 0:D])        # 1/sqrt(head_dim) already folded into W_q, b_q
    kh = to_heads(qkv[:, D:2 * D])
    vh = to_heads(qkv[:, 2 * D:3 * D])

    # batched over (heads * batch): one MXU push for scores, one for PV
    s = jnp.einsum('bqd,bkd->bqk', qh, kh,
                   preferred_element_type=jnp.float32)                 # (HB, TP, TP)
    if TP > T:
        col = lax.broadcasted_iota(jnp.int32, (TP, TP), 1)
        s = s + jnp.where(col < T, 0.0, -1e30).astype(jnp.float32)     # mask pad keys
    s = s - jnp.max(s, axis=-1, keepdims=True)
    p = jnp.exp(s)
    p = p * pl.reciprocal(jnp.sum(p, axis=-1, keepdims=True), approx=True)
    ov = jnp.einsum('bqk,bkd->bqd', p.astype(jnp.bfloat16), vh,
                    preferred_element_type=jnp.float32)                # (HB, TP, hd)
    ov = ov.reshape(H, Bb, TP, hd)
    attn = jnp.concatenate([ov[h] for h in range(H)], axis=-1)         # (Bb, TP, D)
    attn = attn.reshape(M, D)
    attn_out = jnp.dot(attn.astype(jnp.bfloat16), projw_ref[0],
                       preferred_element_type=jnp.float32) + projb
    x = x + ls1 * attn_out

    # ---- MLP branch:  x = x + ls2 * fc2(gelu(fc1(LN2(x)))) ----
    xn2 = _layernorm(x, ln2w, ln2b)
    h1 = jnp.dot(xn2.astype(jnp.bfloat16), fc1w_ref[0],
                 preferred_element_type=jnp.float32) + fc1b
    h1 = _gelu_exact(h1)
    mlp = jnp.dot(h1.astype(jnp.bfloat16), fc2w_ref[0],
                  preferred_element_type=jnp.float32) + fc2b
    x = x + ls2 * mlp

    o_ref[...] = x.reshape(Bb, TP, D)


def transformer_stack(tok, base, sp, batch_blocks=1):
    # tok:  (B, n, D) f32 patch tokens (no cls yet)
    # base: (1, TP, D) f32 = [cls+pos0 | pos1.. | zero padding rows]
    B, n, D = tok.shape
    TP = base.shape[1]
    H = MLP_HIDDEN
    nvec = sp["vecs"].shape[1]
    NB = batch_blocks
    assert B % NB == 0
    Bb = B // NB
    # TODO(synk): on v7x set batch_blocks=2 so both TensorCores get work; keep 1
    # on v5e/v6e so per-layer weights are streamed from HBM exactly once.
    # TODO(synk): at real ViT-L/g scale set vmem_limit_bytes explicitly and tile
    # fc1/fc2 along the hidden dim (extra 'arbitrary' axis); at this size the
    # default scoped VMEM is plenty on all generations.
    return pl.pallas_call(
        _encoder_kernel,
        out_shape=jax.ShapeDtypeStruct((B, TP, D), jnp.float32),
        grid=(NB, DEPTH),
        in_specs=[
            pl.BlockSpec((Bb, n, D), lambda g, d: (g, 0, 0)),      # patch tokens
            pl.BlockSpec((1, TP, D), lambda g, d: (0, 0, 0)),      # cls+pos base
            pl.BlockSpec((1, nvec, D), lambda g, d: (d, 0, 0)),    # packed vectors
            pl.BlockSpec((1, D, 3 * D), lambda g, d: (d, 0, 0)),   # qkv weight (bf16)
            pl.BlockSpec((1, D, D), lambda g, d: (d, 0, 0)),       # proj weight (bf16)
            pl.BlockSpec((1, D, H), lambda g, d: (d, 0, 0)),       # fc1 weight (bf16)
            pl.BlockSpec((1, H, D), lambda g, d: (d, 0, 0)),       # fc2 weight (bf16)
        ],
        out_specs=pl.BlockSpec((Bb, TP, D), lambda g, d: (g, 0, 0)),  # resident x
        compiler_params=pltpu.CompilerParams(
            dimension_semantics=("parallel", "arbitrary")),
    )(tok, base, sp["vecs"], sp["qkvw"], sp["projw"], sp["fc1w"], sp["fc2w"])


# ------------------------------ JAX glue -------------------------------------
def extract_patches(images, patch):
    # NCHW -> (B*Np, C*p*p), flattened in (c, ki, kj) order to match conv weight.
    # Cast to bf16 host-side: patch_embed is mem-bound and this halves its
    # dominant HBM input stream.
    B, C, Hh, Ww = images.shape
    hp, wp = Hh // patch, Ww // patch
    x = images.reshape(B, C, hp, patch, wp, patch)
    x = x.transpose(0, 2, 4, 1, 3, 5)           # (B, hp, wp, C, p, p)
    x = x.reshape(B * hp * wp, C * patch * patch).astype(jnp.bfloat16)
    return x, hp * wp


def init_block_arrays(key):
    D, H, hd = EMBED_DIM, MLP_HIDDEN, HEAD_DIM
    k = jax.random.split(key, 4)
    std = 0.02
    f32 = jnp.float32

    qkvw = jax.random.normal(k[0], (D, 3 * D), f32) * std    # (in, out=[q|k|v])
    qkvb = jnp.zeros((3 * D,), f32)
    projw = jax.random.normal(k[1], (D, D), f32) * std
    projb = jnp.zeros((D,), f32)
    fc1w = jax.random.normal(k[2], (D, H), f32) * std
    fc1b = jnp.zeros((H,), f32)
    fc2w = jax.random.normal(k[3], (H, D), f32) * std
    fc2b = jnp.zeros((D,), f32)
    ln1w, ln1b = jnp.ones((D,), f32), jnp.zeros((D,), f32)
    ln2w, ln2b = jnp.ones((D,), f32), jnp.zeros((D,), f32)
    ls1 = jnp.full((D,), 1e-1, f32)
    ls2 = jnp.full((D,), 1e-1, f32)

    # Fold the attention 1/sqrt(head_dim) scale into the Q columns (static,
    # one-time weight transform -> no per-call multiply in the kernel).
    scale = float(hd) ** -0.5
    qkvw = qkvw.at[:, :D].multiply(scale)
    qkvb = qkvb.at[:D].multiply(scale)

    qb, kb, vb = qkvb[:D], qkvb[D:2 * D], qkvb[2 * D:]
    vecs = jnp.concatenate(
        [jnp.stack([ln1w, ln1b, qb, kb, vb, projb, ls1,
                    ln2w, ln2b, fc2b, ls2], axis=0),
         fc1b.reshape(H // D, D)], axis=0)                    # (NVEC, D)
    return {
        "vecs": vecs,
        "qkvw": qkvw.astype(jnp.bfloat16),
        "projw": projw.astype(jnp.bfloat16),
        "fc1w": fc1w.astype(jnp.bfloat16),
        "fc2w": fc2w.astype(jnp.bfloat16),
    }


def init_params(key, n_patches):
    D, p = EMBED_DIM, PATCH
    keys = jax.random.split(key, 3 + DEPTH)
    std = 0.02
    blocks = [init_block_arrays(keys[3 + i]) for i in range(DEPTH)]
    stacked = {name: jnp.stack([blk[name] for blk in blocks], axis=0)
               for name in blocks[0]}

    T = n_patches + 1
    TP = ((T + SUBLANE - 1) // SUBLANE) * SUBLANE            # pad tokens to sublanes
    cls = jax.random.normal(keys[1], (1, 1, D), jnp.float32) * std
    # pos_embed built at exactly (1 + n_patches) tokens, so the bicubic
    # interpolation in prepare_tokens_with_masks is an identity here.
    pos = jax.random.normal(keys[2], (1, T, D), jnp.float32) * std
    base = jnp.zeros((1, TP, D), jnp.float32)
    base = base.at[:, 0, :].set(cls[:, 0, :] + pos[:, 0, :])
    base = base.at[:, 1:T, :].set(pos[:, 1:, :])

    return {
        # conv weight (D, 3, p, p) reshaped/transposed to (3*p*p, D), bf16
        "patch_w": (jax.random.normal(keys[0], (3 * p * p, D), jnp.float32)
                    * std).astype(jnp.bfloat16),
        "patch_b": jnp.zeros((1, D), jnp.float32),
        "base": base,
        "stack": stacked,
    }


def dinov2_encode(images, params, cls_token=False, batch_blocks=1):
    assert images.shape[2] % PATCH == 0
    assert images.shape[3] % PATCH == 0
    B = images.shape[0]
    patches, n = extract_patches(images, PATCH)
    tok = patch_embed(patches, params["patch_w"], params["patch_b"])   # (B*n, D)
    tok = tok.reshape(B, n, EMBED_DIM)
    # cls concat + pos add + all blocks: one pallas_call (tokens padded to TP)
    x = transformer_stack(tok, params["base"], params["stack"], batch_blocks)
    if cls_token:
        return x[:, 0:1]              # (B, 1, D)
    return x[:, 1:1 + n]              # (B, n, D)  (padding rows dropped)


if __name__ == "__main__":
    key = jax.random.PRNGKey(0)
    k_img, k_par = jax.random.split(key)

    B, H_img, W_img = 2, 56, 56               # 56/14 = 4 -> 16 patch tokens (+ cls)
    images = jax.random.normal(k_img, (B, 3, H_img, W_img), jnp.float32)
    n_patches = (H_img // PATCH) * (W_img // PATCH)
    params = init_params(k_par, n_patches)

    out = dinov2_encode(images, params, cls_token=False)
    out = jax.block_until_ready(out)
    assert out.shape == (B, n_patches, EMBED_DIM), out.shape
    assert bool(jnp.all(jnp.isfinite(out)))

    out_cls = dinov2_encode(images, params, cls_token=True)
    out_cls = jax.block_until_ready(out_cls)
    assert out_cls.shape == (B, 1, EMBED_DIM), out_cls.shape
    assert bool(jnp.all(jnp.isfinite(out_cls)))

    print("KERNEL_OK")
</pallas_src>

<mosaic_0001>
module attributes {stable_mosaic.version = 11 : i64} {
  func.func @_patch_embed_kernel(%arg0: i32, %arg1: memref<32x588xbf16, #tpu.memory_space<vmem>>, %arg2: memref<588x128xbf16, #tpu.memory_space<vmem>>, %arg3: memref<1x128xf32, #tpu.memory_space<vmem>>, %arg4: memref<32x128xf32, #tpu.memory_space<vmem>>) attributes {dimension_semantics = [#tpu.dimension_semantics<parallel>], iteration_bounds = array<i64: 1>, scalar_prefetch = 0 : i64, scratch_operands = 0 : i64, tpu.core_type = #tpu.core_type<tc>, window_params = [{transform_indices = @transform_0, window_bounds = array<i64: 32, 588>}, {pipeline_mode = #tpu.pipeline_mode<synchronous>, transform_indices = @transform_1, window_bounds = array<i64: 588, 128>}, {pipeline_mode = #tpu.pipeline_mode<synchronous>, transform_indices = @transform_2, window_bounds = array<i64: 1, 128>}, {transform_indices = @transform_3, window_bounds = array<i64: 32, 128>}]} {
    %c0 = arith.constant 0 : index
    %c0_0 = arith.constant 0 : index
    %0 = vector.load %arg1[%c0, %c0_0] : memref<32x588xbf16, #tpu.memory_space<vmem>>, vector<32x588xbf16>
    %c0_1 = arith.constant 0 : index
    %c0_2 = arith.constant 0 : index
    %1 = vector.load %arg2[%c0_1, %c0_2] : memref<588x128xbf16, #tpu.memory_space<vmem>>, vector<588x128xbf16>
    %cst = arith.constant dense<0.000000e+00> : vector<32x128xf32>
    %2 = tpu.matmul %0, %1, %cst {dimension_numbers = #tpu.dot_dimension_numbers<[1], [0], [0], [1], [0, 0, 1, 1], [], []>} : vector<32x588xbf16>, vector<588x128xbf16>, vector<32x128xf32> -> vector<32x128xf32>
    %c0_3 = arith.constant 0 : index
    %c0_4 = arith.constant 0 : index
    %3 = vector.load %arg3[%c0_3, %c0_4] : memref<1x128xf32, #tpu.memory_space<vmem>>, vector<1x128xf32>
    %4 = vector.broadcast %3 : vector<1x128xf32> to vector<32x128xf32>
    %5 = arith.addf %2, %4 : vector<32x128xf32>
    %c0_5 = arith.constant 0 : index
    %c0_6 = arith.constant 0 : index
    %6 = vector.load %arg4[%c0_5, %c0_6] : memref<32x128xf32, #tpu.memory_space<vmem>>, vector<32x128xf32>
    tpu.vector_store %arg4[%c0_5, %c0_6], %5 {strides = array<i32>} : memref<32x128xf32, #tpu.memory_space<vmem>>, vector<32x128xf32>,
    return
  }
  func.func @transform_0(%arg0: i32) -> (i32, i32) {
    %c0_i32 = arith.constant 0 : i32
    %c0_i32_0 = arith.constant 0 : i32
    return %arg0, %c0_i32 : i32, i32
  }
  func.func @transform_1(%arg0: i32) -> (i32, i32) {
    %c0_i32 = arith.constant 0 : i32
    %c0_i32_0 = arith.constant 0 : i32
    %c0_i32_1 = arith.constant 0 : i32
    return %c0_i32, %c0_i32_0 : i32, i32
  }
  func.func @transform_2(%arg0: i32) -> (i32, i32) {
    %c0_i32 = arith.constant 0 : i32
    %c0_i32_0 = arith.constant 0 : i32
    %c0_i32_1 = arith.constant 0 : i32
    return %c0_i32, %c0_i32_0 : i32, i32
  }
  func.func @transform_3(%arg0: i32) -> (i32, i32) {
    %c0_i32 = arith.constant 0 : i32
    %c0_i32_0 = arith.constant 0 : i32
    return %arg0, %c0_i32 : i32, i32
  }
}

</mosaic_0001>

<llo_original>
// kernel: tpu_custom_call.1
$region0: #{tpu_custom_call.1}
  #allocation0 [shape = 'u32[]', space=smem, size = 0x4, offset = 0x4, fixed_abs, tag = 'smem constant byte address 0x4 - core index']
  #allocation1 [shape = 'u32[144,128]{1,0:T(1,128)}', space=vmem, size = 0x12000, scoped, tag = 'internal scratch']
  %s0 = inlined_call_operand.hbm [shape: bf16[32,588], index: 0, kind: input, shape index: {}]
  %s1 = inlined_call_operand.hbm [shape: bf16[588,128], index: 1, kind: input, shape index: {}]
  %s2 = inlined_call_operand.vmem [shape: f32[1,128], index: 2, kind: input, shape index: {}]
  %s3 = inlined_call_operand.hbm [shape: f32[32,128], index: 3, kind: output, shape index: {}]
  %s4 = sld [smem:[#allocation0]]
  $region30: #{tpu_custom_call.1} parent=0
    _
  %s6 = ssub.s32 1, %s4
  %s7 = scalar_select 0, %s6, %s4
  $region1: #{tpu_custom_call.1} parent=0
    #allocation2 [shape = 'u8[40960]{0}', space=vmem, size = 0xa000, scoped, tag = 'input window, operand 0, single buffered']
    #allocation3 [shape = 's32[1]{0}', space=sflag, size = 0x4, scoped, tag = 'scoped memory for tpu_custom_call.1']
    #allocation4 [shape = 's32[1]{0}', space=sflag, size = 0x4, scoped, tag = 'scoped memory for tpu_custom_call.1']
    #allocation5 [shape = 'u8[151552]{0}', space=vmem, size = 0x25000, scoped, tag = 'input window, operand 1, single buffered']
    #allocation6 [shape = 's32[1]{0}', space=sflag, size = 0x4, scoped, tag = 'scoped memory for tpu_custom_call.1']
    #allocation7 [shape = 'u8[16384]{0}', space=vmem, size = 0x4000, scoped, tag = 'output window, operand 0, single buffered']
    %8 = vsyncpa [#allocation3], 0
    %9 = vsyncpa [#allocation6], 0
    %10 = vsyncpa [#allocation4], 0
    // Predicated region
    $region2: #{tpu_custom_call.1} parent=1 // pred_check
      _
    $region3: #{tpu_custom_call.1} parent=1 // pred_check_branch
      %12 = sbr.rel (0) target = $region5
    $region4: #{tpu_custom_call.1} parent=1 // pred_region
      %s14 = ssub.s32 1280, 1280
      %15 = vsyncadd [#allocation3], %s14
      %s16 = sshll.u32 [#allocation2], 4
      %s17 = int_to_ptr.vmem [resolvable:$true] %s16
      %22 = dma.hbm_to_vmem [thread:$0]  %s0, 1280, %s17, [#allocation3], 320, 320, 20
    $region5: #{tpu_custom_call.1} parent=1 // pred_fallthru
      _
    // Predicated region
    $region6: #{tpu_custom_call.1} parent=1 // pred_check
      _
    $region7: #{tpu_custom_call.1} parent=1 // pred_check_branch
      %24 = sbr.rel (0) target = $region9
    $region8: #{tpu_custom_call.1} parent=1 // pred_region
      %s26 = ssub.s32 4736, 4736
      %27 = vsyncadd [#allocation6], %s26
      %s28 = sshll.u32 [#allocation5], 4
      %s29 = int_to_ptr.vmem [resolvable:$true] %s28
      %34 = dma.hbm_to_vmem [thread:$0]  %s1, 4736, %s29, [#allocation6], 64, 64, 4
    $region9: #{tpu_custom_call.1} parent=1 // pred_fallthru
      _
    // Predicated region
    $region10: #{tpu_custom_call.1} parent=1 // pred_check
      _
    $region11: #{tpu_custom_call.1} parent=1 // pred_check_branch
      %36 = sbr.rel (0) target = $region13
    $region12: #{tpu_custom_call.1} parent=1 // pred_region
      _
    $region13: #{tpu_custom_call.1} parent=1 // pred_fallthru
      _
    // Predicated region
    $region14: #{tpu_custom_call.1} parent=1 // pred_check
      _
    $region15: #{tpu_custom_call.1} parent=1 // pred_check_branch
      %38 = sbr.rel (0) target = $region17
    $region16: #{tpu_custom_call.1} parent=1 // pred_region
      %39 = dma.done [#allocation3], 1280
    $region17: #{tpu_custom_call.1} parent=1 // pred_fallthru
      _
    // Predicated region
    $region18: #{tpu_custom_call.1} parent=1 // pred_check
      _
    $region19: #{tpu_custom_call.1} parent=1 // pred_check_branch
      %41 = sbr.rel (0) target = $region21
    $region20: #{tpu_custom_call.1} parent=1 // pred_region
      %42 = dma.done [#allocation6], 4736
    $region21: #{tpu_custom_call.1} parent=1 // pred_fallthru
      _
    %v44 = vld [vmem:[#allocation2] sm:$0xff]
    %v45 = vld [vmem:[#allocation2 + $0x8] sm:$0xff]
    %v46 = vld [vmem:[#allocation2 + $0x10] sm:$0xf]
    %v47 = vld [vmem:[#allocation2 + $0x14] sm:$0xff]
    %v48 = vld [vmem:[#allocation2 + $0x1c] sm:$0xff]
    %v49 = vld [vmem:[#allocation2 + $0x24] sm:$0xf]
    %v50 = vld [vmem:[#allocation2 + $0x28] sm:$0xff]
    %v51 = vld [vmem:[#allocation2 + $0x30] sm:$0xff]
    %v52 = vld [vmem:[#allocation2 + $0x38] sm:$0xf]
    %v53 = vld [vmem:[#allocation2 + $0x3c] sm:$0xff]
    %v54 = vld [vmem:[#allocation2 + $0x44] sm:$0xff]
    %v55 = vld [vmem:[#allocation2 + $0x4c] sm:$0xf]
    %v56 = vld [vmem:[#allocation5] sm:$0xf]
    %v57 = vld [vmem:[#allocation5 + $0x4] sm:$0xf]
    %v58 = vld [vmem:[#allocation5 + $0x8] sm:$0xf]
    %v59 = vld [vmem:[#allocation5 + $0xc] sm:$0xf]
    %v60 = vld [vmem:[#allocation5 + $0x10] sm:$0xf]
    %v61 = vld [vmem:[#allocation5 + $0x14] sm:$0xf]
    %v62 = vld [vmem:[#allocation5 + $0x18] sm:$0xf]
    %v63 = vld [vmem:[#allocation5 + $0x1c] sm:$0xf]
    %v64 = vld [vmem:[#allocation5 + $0x20] sm:$0xf]
    %v65 = vld [vmem:[#allocation5 + $0x24] sm:$0xf]
    %v66 = vld [vmem:[#allocation5 + $0x28] sm:$0xf]
    %v67 = vld [vmem:[#allocation5 + $0x2c] sm:$0xf]
    %v68 = vld [vmem:[#allocation5 + $0x30] sm:$0xf]
    %v69 = vld [vmem:[#allocation5 + $0x34] sm:$0xf]
    %v70 = vld [vmem:[#allocation5 + $0x38] sm:$0xf]
    %v71 = vld [vmem:[#allocation5 + $0x3c] sm:$0xf]
    %v72 = vld [vmem:[#allocation5 + $0x40] sm:$0xf]
    %v73 = vld [vmem:[#allocation5 + $0x44] sm:$0xf]
    %v74 = vld [vmem:[#allocation5 + $0x48] sm:$0xf]
    %v75 = vld [vmem:[#allocation5 + $0x4c] sm:$0xf]
    %v76 = vld [vmem:[#allocation5 + $0x50] sm:$0xf]
    %v77 = vld [vmem:[#allocation5 + $0x54] sm:$0xf]
    %v78 = vld [vmem:[#allocation5 + $0x58] sm:$0xf]
    %v79 = vld [vmem:[#allocation5 + $0x5c] sm:$0xf]
    %v80 = vld [vmem:[#allocation5 + $0x60] sm:$0xf]
    %v81 = vld [vmem:[#allocation5 + $0x64] sm:$0xf]
    %v82 = vld [vmem:[#allocation5 + $0x68] sm:$0xf]
    %v83 = vld [vmem:[#allocation5 + $0x6c] sm:$0xf]
    %v84 = vld [vmem:[#allocation5 + $0x70] sm:$0xf]
    %v85 = vld [vmem:[#allocation5 + $0x74] sm:$0xf]
    %v86 = vld [vmem:[#allocation5 + $0x78] sm:$0xf]
    %v87 = vld [vmem:[#allocation5 + $0x7c] sm:$0xf]
    %v88 = vld [vmem:[#allocation5 + $0x80] sm:$0xf]
    %v89 = vld [vmem:[#allocation5 + $0x84] sm:$0xf]
    %v90 = vld [vmem:[#allocation5 + $0x88] sm:$0xf]
    %v91 = vld [vmem:[#allocation5 + $0x8c] sm:$0xf]
    %v92 = vld [vmem:[#allocation5 + $0x90] sm:$0xf]
    %v93 = vld [vmem:[#allocation5 + $0x94] sm:$0xf]
    %v94 = vld [vmem:[#allocation5 + $0x98] sm:$0xf]
    %v95 = vld [vmem:[#allocation5 + $0x9c] sm:$0xf]
    %v96 = vld [vmem:[#allocation5 + $0xa0] sm:$0xf]
    %v97 = vld [vmem:[#allocation5 + $0xa4] sm:$0xf]
    %v98 = vld [vmem:[#allocation5 + $0xa8] sm:$0xf]
    %v99 = vld [vmem:[#allocation5 + $0xac] sm:$0xf]
    %v100 = vld [vmem:[#allocation5 + $0xb0] sm:$0xf]
    %v101 = vld [vmem:[#allocation5 + $0xb4] sm:$0xf]
    %v102 = vld [vmem:[#allocation5 + $0xb8] sm:$0xf]
    %v103 = vld [vmem:[#allocation5 + $0xbc] sm:$0xf]
    %v104 = vld [vmem:[#allocation5 + $0xc0] sm:$0xf]
    %v105 = vld [vmem:[#allocation5 + $0xc4] sm:$0xf]
    %v106 = vld [vmem:[#allocation5 + $0xc8] sm:$0xf]
    %v107 = vld [vmem:[#allocation5 + $0xcc] sm:$0xf]
    %v108 = vld [vmem:[#allocation5 + $0xd0] sm:$0xf]
    %v109 = vld [vmem:[#allocation5 + $0xd4] sm:$0xf]
    %v110 = vld [vmem:[#allocation5 + $0xd8] sm:$0xf]
    %v111 = vld [vmem:[#allocation5 + $0xdc] sm:$0xf]
    %v112 = vld [vmem:[#allocation5 + $0xe0] sm:$0xf]
    %v113 = vld [vmem:[#allocation5 + $0xe4] sm:$0xf]
    %v114 = vld [vmem:[#allocation5 + $0xe8] sm:$0xf]
    %v115 = vld [vmem:[#allocation5 + $0xec] sm:$0xf]
    %v116 = vld [vmem:[#allocation5 + $0xf0] sm:$0xf]
    %v117 = vld [vmem:[#allocation5 + $0xf4] sm:$0xf]
    %v118 = vld [vmem:[#allocation5 + $0xf8] sm:$0xf]
    %v119 = vld [vmem:[#allocation5 + $0xfc] sm:$0xf]
    %v120 = vld [vmem:[#allocation5 + $0x100] sm:$0xf]
    %v121 = vld [vmem:[#allocation5 + $0x104] sm:$0xf]
    %v122 = vld [vmem:[#allocation5 + $0x108] sm:$0xf]
    %v123 = vld [vmem:[#allocation5 + $0x10c] sm:$0xf]
    %v124 = vld [vmem:[#allocation5 + $0x110] sm:$0xf]
    %v125 = vld [vmem:[#allocation5 + $0x114] sm:$0xf]
    %v126 = vld [vmem:[#allocation5 + $0x118] sm:$0xf]
    %v127 = vld [vmem:[#allocation5 + $0x11c] sm:$0xf]
    %v128 = vld [vmem:[#allocation5 + $0x120] sm:$0xf]
    %v129 = vld [vmem:[#allocation5 + $0x124] sm:$0x3]
    %v130 = vld [vmem:[%s2] sm:$0x1]
    %v132 = vlaneseq
    %v133 = vshrl.u32 %v132, 7
    %v134 = vsub.s32 0, %v133
    %v135 = vrot.slane %v130, %v134
    %v149 = vunpack.c.l.b16 %v44
    %v150 = vunpack.c.h.b16 %v44
    %v151 = vunpack.c.l.b16 %v45
    %v152 = vunpack.c.h.b16 %v45
    %v153 = vunpack.c.l.b16 %v46
    %v154 = vunpack.c.l.b16 %v47
    %v155 = vunpack.c.h.b16 %v47
    %v156 = vunpack.c.l.b16 %v48
    %v157 = vunpack.c.h.b16 %v48
    %v158 = vunpack.c.l.b16 %v49
    %v159 = vunpack.c.l.b16 %v50
    %v160 = vunpack.c.h.b16 %v50
    %v161 = vunpack.c.l.b16 %v51
    %v162 = vunpack.c.h.b16 %v51
    %v163 = vunpack.c.l.b16 %v52
    %v164 = vunpack.c.l.b16 %v53
    %v165 = vunpack.c.h.b16 %v53
    %v166 = vunpack.c.l.b16 %v54
    %v167 = vunpack.c.h.b16 %v54
    %v168 = vunpack.c.l.b16 %v55
    %v169 = vpack.c.b16 %v154, %v149
    %v170 = vpack.c.b16 %v155, %v150
    %v171 = vpack.c.b16 %v156, %v151
    %v172 = vpack.c.b16 %v157, %v152
    %v173 = vpack.c.b16 %v158, %v153
    %v174 = vpack.c.b16 %v164, %v159
    %v175 = vpack.c.b16 %v165, %v160
    %v176 = vpack.c.b16 %v166, %v161
    %v177 = vpack.c.b16 %v167, %v162
    %v178 = vpack.c.b16 %v168, %v163
    %v261 = vunpack.c.l.b16 %v56
    %v262 = vunpack.c.l.b16 %v57
    %v263 = vunpack.c.l.b16 %v58
    %v264 = vunpack.c.l.b16 %v59
    %v265 = vunpack.c.l.b16 %v60
    %v266 = vunpack.c.l.b16 %v61
    %v267 = vunpack.c.l.b16 %v62
    %v268 = vunpack.c.l.b16 %v63
    %v269 = vunpack.c.l.b16 %v64
    %v270 = vunpack.c.l.b16 %v65
    %v271 = vunpack.c.l.b16 %v66
    %v272 = vunpack.c.l.b16 %v67
    %v273 = vunpack.c.l.b16 %v68
    %v274 = vunpack.c.l.b16 %v69
    %v275 = vunpack.c.l.b16 %v70
    %v276 = vunpack.c.l.b16 %v71
    %v277 = vunpack.c.l.b16 %v72
    %v278 = vunpack.c.l.b16 %v73
    %v279 = vunpack.c.l.b16 %v74
    %v280 = vunpack.c.l.b16 %v75
    %v281 = vunpack.c.l.b16 %v76
    %v282 = vunpack.c.l.b16 %v77
    %v283 = vunpack.c.l.b16 %v78
    %v284 = vunpack.c.l.b16 %v79
    %v285 = vunpack.c.l.b16 %v80
    %v286 = vunpack.c.l.b16 %v81
    %v287 = vunpack.c.l.b16 %v82
    %v288 = vunpack.c.l.b16 %v83
    %v289 = vunpack.c.l.b16 %v84
    %v290 = vunpack.c.l.b16 %v85
    %v291 = vunpack.c.l.b16 %v86
    %v292 = vunpack.c.l.b16 %v87
    %v293 = vunpack.c.l.b16 %v88
    %v294 = vunpack.c.l.b16 %v89
    %v295 = vunpack.c.l.b16 %v90
    %v296 = vunpack.c.l.b16 %v91
    %v297 = vunpack.c.l.b16 %v92
    %v298 = vunpack.c.l.b16 %v93
    %v299 = vunpack.c.l.b16 %v94
    %v300 = vunpack.c.l.b16 %v95
    %v301 = vunpack.c.l.b16 %v96
    %v302 = vunpack.c.l.b16 %v97
    %v303 = vunpack.c.l.b16 %v98
    %v304 = vunpack.c.l.b16 %v99
    %v305 = vunpack.c.l.b16 %v100
    %v306 = vunpack.c.l.b16 %v101
    %v307 = vunpack.c.l.b16 %v102
    %v308 = vunpack.c.l.b16 %v103
    %v309 = vunpack.c.l.b16 %v104
    %v310 = vunpack.c.l.b16 %v105
    %v311 = vunpack.c.l.b16 %v106
    %v312 = vunpack.c.l.b16 %v107
    %v313 = vunpack.c.l.b16 %v108
    %v314 = vunpack.c.l.b16 %v109
    %v315 = vunpack.c.l.b16 %v110
    %v316 = vunpack.c.l.b16 %v111
    %v317 = vunpack.c.l.b16 %v112
    %v318 = vunpack.c.l.b16 %v113
    %v319 = vunpack.c.l.b16 %v114
    %v320 = vunpack.c.l.b16 %v115
    %v321 = vunpack.c.l.b16 %v116
    %v322 = vunpack.c.l.b16 %v117
    %v323 = vunpack.c.l.b16 %v118
    %v324 = vunpack.c.l.b16 %v119
    %v325 = vunpack.c.l.b16 %v120
    %v326 = vunpack.c.l.b16 %v121
    %v327 = vunpack.c.l.b16 %v122
    %v328 = vunpack.c.l.b16 %v123
    %v329 = vunpack.c.l.b16 %v124
    %v330 = vunpack.c.l.b16 %v125
    %v331 = vunpack.c.l.b16 %v126
    %v332 = vunpack.c.l.b16 %v127
    %v333 = vunpack.c.l.b16 %v128
    %v334 = vunpack.c.l.b16 %v129
    %v335 = vpack.c.b16 %v262, %v261
    %v336 = vpack.c.b16 %v264, %v263
    %v337 = vpack.c.b16 %v266, %v265
    %v338 = vpack.c.b16 %v268, %v267
    %v339 = vpack.c.b16 %v270, %v269
    %v340 = vpack.c.b16 %v272, %v271
    %v341 = vpack.c.b16 %v274, %v273
    %v342 = vpack.c.b16 %v276, %v275
    %v343 = vpack.c.b16 %v278, %v277
    %v344 = vpack.c.b16 %v280, %v279
    %v345 = vpack.c.b16 %v282, %v281
    %v346 = vpack.c.b16 %v284, %v283
    %v347 = vpack.c.b16 %v286, %v285
    %v348 = vpack.c.b16 %v288, %v287
    %v349 = vpack.c.b16 %v290, %v289
    %v350 = vpack.c.b16 %v292, %v291
    %v351 = vpack.c.b16 %v294, %v293
    %v352 = vpack.c.b16 %v296, %v295
    %v353 = vpack.c.b16 %v298, %v297
    %v354 = vpack.c.b16 %v300, %v299
    %v355 = vpack.c.b16 %v302, %v301
    %v356 = vpack.c.b16 %v304, %v303
    %v357 = vpack.c.b16 %v306, %v305
    %v358 = vpack.c.b16 %v308, %v307
    %v359 = vpack.c.b16 %v310, %v309
    %v360 = vpack.c.b16 %v312, %v311
    %v361 = vpack.c.b16 %v314, %v313
    %v362 = vpack.c.b16 %v316, %v315
    %v363 = vpack.c.b16 %v318, %v317
    %v364 = vpack.c.b16 %v320, %v319
    %v365 = vpack.c.b16 %v322, %v321
    %v366 = vpack.c.b16 %v324, %v323
    %v367 = vpack.c.b16 %v326, %v325
    %v368 = vpack.c.b16 %v328, %v327
    %v369 = vpack.c.b16 %v330, %v329
    %v370 = vpack.c.b16 %v332, %v331
    %v371 = vpack.c.b16 %v334, %v333
    %vm408 = vcmask 621568
    %v410 = vsel %vm408, %v173, 0
    %v413 = vsel %vm408, %v178, 0
    %vm415 = vcmask 1045504
    %v417 = vsel %vm415, %v371, 0
    %419 = vmatprep.subr.bf16.mxu0 0
    %420 = vmatpush1.bf16.msra.mxu0 %v335
    %421 = vmatprep.subr.bf16.mxu0 0
    %422 = vmatpush1.bf16.msra.mxu0 %v336
    %423 = vmatprep.subr.bf16.mxu0 0
    %424 = vmatpush1.bf16.msra.mxu0 %v337
    %425 = vmatprep.subr.bf16.mxu0 0
    %426 = vmatpush1.bf16.msra.mxu0 %v338
    %427 = vmatprep.subr.bf16.mxu0 0
    %428 = vmatpush1.bf16.msra.mxu0 %v339
    %429 = vmatprep.subr.bf16.mxu0 0
    %430 = vmatpush1.bf16.msra.mxu0 %v340
    %431 = vmatprep.subr.bf16.mxu0 0
    %432 = vmatpush1.bf16.msra.mxu0 %v341
    %433 = vmatprep.subr.bf16.mxu0 0
    %434 = vmatpush1.bf16.msra.mxu0 %v342
    %435 = vmatprep.subr.bf16.mxu0 0
    %436 = vmatpush1.bf16.msra.mxu0 %v343
    %437 = vmatprep.subr.bf16.mxu0 0
    %438 = vmatpush1.bf16.msra.mxu0 %v344
    %439 = vmatprep.subr.bf16.mxu0 0
    %440 = vmatpush1.bf16.msra.mxu0 %v345
    %441 = vmatprep.subr.bf16.mxu0 0
    %442 = vmatpush1.bf16.msra.mxu0 %v346
    %443 = vmatprep.subr.bf16.mxu0 0
    %444 = vmatpush1.bf16.msra.mxu0 %v347
    %445 = vmatprep.subr.bf16.mxu0 0
    %446 = vmatpush1.bf16.msra.mxu0 %v348
    %447 = vmatprep.subr.bf16.mxu0 0
    %448 = vmatpush1.bf16.msra.mxu0 %v349
    %449 = vmatprep.subr.bf16.mxu0 0
    %450 = vmatpush1.bf16.msra.mxu0 %v350
    %451 = vmatprep.mubr.bf16.mxu0 %v170
    %452 = vmatmul.mubr.bf16.gmra.mrb[0].mxu0 %v169
    %v453 = vpop.f32.mrb[0].mxu0
    %v454 = vadd.f32 %v135, %v453
    %v455 = vpop.f32.mrb[0].mxu0
    %v456 = vpop.f32.mrb[0].mxu0
    %v457 = vadd.f32 %v135, %v456
    %v458 = vpop.f32.mrb[0].mxu0
    %459 = vmatprep.mubr.bf16.mxu0 %v175
    %460 = vmatmul.mubr.bf16.gmra.mrb[0].mxu0 %v174
    %v461 = vpop.f32.mrb[0].mxu0
    %v462 = vadd.f32 %v135, %v461
    %v463 = vpop.f32.mrb[0].mxu0
    %v464 = vpop.f32.mrb[0].mxu0
    %v465 = vadd.f32 %v135, %v464
    %v466 = vpop.f32.mrb[0].mxu0
    %467 = vdwg.mxu0
    %468 = vmatprep.subr.bf16.mxu0 0
    %469 = vmatpush1.bf16.msra.mxu0 %v351
    %470 = vmatprep.subr.bf16.mxu0 0
    %471 = vmatpush1.bf16.msra.mxu0 %v352
    %472 = vmatprep.subr.bf16.mxu0 0
    %473 = vmatpush1.bf16.msra.mxu0 %v353
    %474 = vmatprep.subr.bf16.mxu0 0
    %475 = vmatpush1.bf16.msra.mxu0 %v354
    %476 = vmatprep.subr.bf16.mxu0 0
    %477 = vmatpush1.bf16.msra.mxu0 %v355
    %478 = vmatprep.subr.bf16.mxu0 0
    %479 = vmatpush1.bf16.msra.mxu0 %v356
    %480 = vmatprep.subr.bf16.mxu0 0
    %481 = vmatpush1.bf16.msra.mxu0 %v357
    %482 = vmatprep.subr.bf16.mxu0 0
    %483 = vmatpush1.bf16.msra.mxu0 %v358
    %484 = vmatprep.subr.bf16.mxu0 0
    %485 = vmatpush1.bf16.msra.mxu0 %v359
    %486 = vmatprep.subr.bf16.mxu0 0
    %487 = vmatpush1.bf16.msra.mxu0 %v360
    %488 = vmatprep.subr.bf16.mxu0 0
    %489 = vmatpush1.bf16.msra.mxu0 %v361
    %490 = vmatprep.subr.bf16.mxu0 0
    %491 = vmatpush1.bf16.msra.mxu0 %v362
    %492 = vmatprep.subr.bf16.mxu0 0
    %493 = vmatpush1.bf16.msra.mxu0 %v363
    %494 = vmatprep.subr.bf16.mxu0 0
    %495 = vmatpush1.bf16.msra.mxu0 %v364
    %496 = vmatprep.subr.bf16.mxu0 0
    %497 = vmatpush1.bf16.msra.mxu0 %v365
    %498 = vmatprep.subr.bf16.mxu0 0
    %499 = vmatpush1.bf16.msra.mxu0 %v366
    %500 = vmatprep.mubr.bf16.mxu0 %v172
    %501 = vmatmul.mubr.bf16.gmra.mrb[0].mxu0 %v171
    %v502 = vpop.f32.mrb[0].mxu0
    %v503 = vadd.f32 %v454, %v502
    %v504 = vpop.f32.mrb[0].mxu0
    %v505 = vpop.f32.mrb[0].mxu0
    %v506 = vadd.f32 %v457, %v505
    %v507 = vpop.f32.mrb[0].mxu0
    %508 = vmatprep.mubr.bf16.mxu0 %v177
    %509 = vmatmul.mubr.bf16.gmra.mrb[0].mxu0 %v176
    %v510 = vpop.f32.mrb[0].mxu0
    %v511 = vadd.f32 %v462, %v510
    %v512 = vpop.f32.mrb[0].mxu0
    %v513 = vpop.f32.mrb[0].mxu0
    %v514 = vadd.f32 %v465, %v513
    %v515 = vpop.f32.mrb[0].mxu0
    %516 = vdwg.mxu0
    %517 = vmatprep.subr.bf16.mxu0 0
    %518 = vmatpush1.bf16.msra.mxu0 %v367
    %519 = vmatprep.subr.bf16.mxu0 0
    %520 = vmatpush1.bf16.msra.mxu0 %v368
    %521 = vmatprep.subr.bf16.mxu0 0
    %522 = vmatpush1.bf16.msra.mxu0 %v369
    %523 = vmatprep.subr.bf16.mxu0 0
    %524 = vmatpush1.bf16.msra.mxu0 %v370
    %525 = vmatprep.subr.bf16.mxu0 0
    %526 = vmatpush1.bf16.msra.mxu0 %v417
    %527 = vmatprep.subr.bf16.mxu0 0
    %528 = vmatpush1.bf16.msra.mxu0 0
    %529 = vmatprep.subr.bf16.mxu0 0
    %530 = vmatpush1.bf16.msra.mxu0 0
    %531 = vmatprep.subr.bf16.mxu0 0
    %532 = vmatpush1.bf16.msra.mxu0 0
    %533 = vmatprep.subr.bf16.mxu0 0
    %534 = vmatpush1.bf16.msra.mxu0 0
    %535 = vmatprep.subr.bf16.mxu0 0
    %536 = vmatpush1.bf16.msra.mxu0 0
    %537 = vmatprep.subr.bf16.mxu0 0
    %538 = vmatpush1.bf16.msra.mxu0 0
    %539 = vmatprep.subr.bf16.mxu0 0
    %540 = vmatpush1.bf16.msra.mxu0 0
    %541 = vmatprep.subr.bf16.mxu0 0
    %542 = vmatpush1.bf16.msra.mxu0 0
    %543 = vmatprep.subr.bf16.mxu0 0
    %544 = vmatpush1.bf16.msra.mxu0 0
    %545 = vmatprep.subr.bf16.mxu0 0
    %546 = vmatpush1.bf16.msra.mxu0 0
    %547 = vmatprep.subr.bf16.mxu0 0
    %548 = vmatpush1.bf16.msra.mxu0 0
    %549 = vmatprep.mubr.bf16.mxu0 0
    %550 = vmatmul.mubr.bf16.gmra.mrb[0].mxu0 %v410
    %v551 = vpop.f32.mrb[0].mxu0
    %v552 = vadd.f32 %v503, %v551
    %v553 = vpop.f32.mrb[0].mxu0
    %v554 = vpop.f32.mrb[0].mxu0
    %v555 = vadd.f32 %v506, %v554
    %v556 = vpop.f32.mrb[0].mxu0
    %557 = vmatprep.mubr.bf16.mxu0 0
    %558 = vmatmul.mubr.bf16.gmra.mrb[0].mxu0 %v413
    %v559 = vpop.f32.mrb[0].mxu0
    %v560 = vadd.f32 %v511, %v559
    %v561 = vpop.f32.mrb[0].mxu0
    %v562 = vpop.f32.mrb[0].mxu0
    %v563 = vadd.f32 %v514, %v562
    %v564 = vpop.f32.mrb[0].mxu0
    %565 = vdwg.mxu0
    %566 = vst [vmem:[#allocation7] sm:$0xff] %v552
    %567 = vst [vmem:[#allocation7 + $0x8] sm:$0xff] %v555
    %568 = vst [vmem:[#allocation7 + $0x10] sm:$0xff] %v560
    %569 = vst [vmem:[#allocation7 + $0x18] sm:$0xff] %v563
    // Predicated region
    $region22: #{tpu_custom_call.1} parent=1 // pred_check
      _
    $region23: #{tpu_custom_call.1} parent=1 // pred_check_branch
      %571 = sbr.rel (0) target = $region25
    $region24: #{tpu_custom_call.1} parent=1 // pred_region
      %s573 = ssub.s32 512, 512
      %574 = vsyncadd [#allocation4], %s573
      %s575 = sshll.u32 [#allocation7], 4
      %s576 = int_to_ptr.vmem [resolvable:$true] %s575
      %581 = dma.vmem_to_hbm [thread:$0]  %s576, 512, %s3, [#allocation4], 128, 128, 8
    $region25: #{tpu_custom_call.1} parent=1 // pred_fallthru
      _
    // Predicated region
    $region26: #{tpu_custom_call.1} parent=1 // pred_check
      _
    $region27: #{tpu_custom_call.1} parent=1 // pred_check_branch
      %583 = sbr.rel (0) target = $region29
    $region28: #{tpu_custom_call.1} parent=1 // pred_region
      %584 = dma.done [#allocation4], 512
    $region29: #{tpu_custom_call.1} parent=1 // pred_fallthru
      _
    %585 = vsyncpa [#allocation3], 1
    %586 = vsyncpa [#allocation6], 1
    %587 = vsyncpa [#allocation4], 1

</llo_original>
